<compile_context>
chip_gen: v7x
topology: tpu7x:2x2x1
jax: 0.10.0
libtpu: 0.0.40
codegen_flags: <defaults>
</compile_context>

<pallas_src>
import jax
import jax.numpy as jnp
from jax.experimental import pallas as pl
from jax.experimental.pallas import tpu as pltpu


_VMEM = pl.BlockSpec(memory_space=pltpu.MemorySpace.VMEM)
_SMEM = pl.BlockSpec(memory_space=pltpu.MemorySpace.SMEM)


# ---------------------------------------------------------------------------
# Fused Pallas kernel: one-hot (folded embedding) + n_layers x LSTM cell + fc
# ---------------------------------------------------------------------------
def _make_decoder_kernel(n_layers, batch, hid, vocab):
    def kernel(tok_ref, h0_ref, c0_ref, *refs):
        layer_refs = refs[: 2 * n_layers]          # (W_cat, b) per layer
        fc_w_ref = refs[2 * n_layers]
        fc_b_ref = refs[2 * n_layers + 1]
        pred_ref = refs[2 * n_layers + 2]
        h_out_ref = refs[2 * n_layers + 3]
        c_out_ref = refs[2 * n_layers + 4]

        H = hid

        # Build the one-hot [B, V] from SMEM token scalars (batch is small and
        # static -> unrolled VPU selects, no gather, no lane-sparse VMEM tile).
        col = jax.lax.broadcasted_iota(jnp.int32, (batch, vocab), 1)
        row = jax.lax.broadcasted_iota(jnp.int32, (batch, vocab), 0)
        tok_b = jnp.zeros((batch, vocab), jnp.int32)
        for b in range(batch):
            tok_b = jnp.where(row == b, tok_ref[b], tok_b)
        x = (col == tok_b).astype(jnp.float32)     # layer-0 "input" (emb folded)

        for l in range(n_layers):
            w_cat = layer_refs[2 * l][...]          # [(V or H)+H, 4H] bf16
            bias = layer_refs[2 * l + 1][...]       # [1, 4H] f32 (b_ih+b_hh folded)
            h = h0_ref[l]                           # [B, H] f32
            c = c0_ref[l]                           # [B, H] f32

            # Single fused MXU dot per layer: gates = [x, h] @ [w_in ; w_hh] + b
            xin = jnp.concatenate([x, h], axis=-1).astype(jnp.bfloat16)
            gates = jnp.dot(xin, w_cat, preferred_element_type=jnp.float32) + bias

            # Gate column order (i, f, o, g): one contiguous sigmoid + one tanh.
            ifo = jax.nn.sigmoid(gates[:, : 3 * H])
            g_g = jnp.tanh(gates[:, 3 * H:])
            i_g = ifo[:, 0:H]
            f_g = ifo[:, H:2 * H]
            o_g = ifo[:, 2 * H:3 * H]

            c_new = f_g * c + i_g * g_g             # f32 elementwise
            h_new = o_g * jnp.tanh(c_new)
            h_out_ref[l] = h_new                    # read-before-write per layer
            c_out_ref[l] = c_new                    # -> safe with h/c aliasing
            x = h_new

        # Output projection (small vocab: fc_w fully VMEM-resident).
        pred_ref[...] = (
            jnp.dot(x.astype(jnp.bfloat16), fc_w_ref[...],
                    preferred_element_type=jnp.float32)
            + fc_b_ref[...]
        )

    return kernel


# ---------------------------------------------------------------------------
# Wrapper
# ---------------------------------------------------------------------------
def decoder_forward(params, tokens, hidden):
    """tokens: [B] int32, hidden: (h, c) each [L, B, H] -> (pred [B, V], (h', c'))."""
    h0, c0 = hidden
    n_layers, batch, hid = h0.shape
    vocab = params["fc_b"].shape[-1]
    tok = tokens.astype(jnp.int32)

    flat_w = []
    for lyr in params["lstm"]:
        flat_w += [lyr["w_cat"], lyr["b"]]

    inputs = (tok, h0, c0, *flat_w, params["fc_w"], params["fc_b"])
    kernel = _make_decoder_kernel(n_layers, batch, hid, vocab)

    # Advisory cost estimate for XLA scheduling of the decode step.
    flops = 2 * batch * ((vocab + hid) * 4 * hid
                         + (n_layers - 1) * (2 * hid) * 4 * hid
                         + hid * vocab)
    transcendentals = batch * n_layers * 5 * hid
    bytes_accessed = sum(int(a.size) * a.dtype.itemsize for a in inputs)
    bytes_accessed += (batch * vocab + 2 * n_layers * batch * hid) * 4

    in_specs = [_SMEM] + [_VMEM] * (len(inputs) - 1)

    pred, h_new, c_new = pl.pallas_call(
        kernel,
        out_shape=(
            jax.ShapeDtypeStruct((batch, vocab), jnp.float32),
            jax.ShapeDtypeStruct((n_layers, batch, hid), jnp.float32),
            jax.ShapeDtypeStruct((n_layers, batch, hid), jnp.float32),
        ),
        in_specs=in_specs,
        out_specs=(_VMEM, _VMEM, _VMEM),
        # h0 -> h_out, c0 -> c_out reuse the same HBM buffers.
        input_output_aliases={1: 1, 2: 2},
        cost_estimate=pl.CostEstimate(
            flops=flops,
            transcendentals=transcendentals,
            bytes_accessed=bytes_accessed,
        ),
    )(*inputs)
    return pred, (h_new, c_new)


# ---------------------------------------------------------------------------
# Parameter init (PyTorch-style ranges).
#   * embedding folded into layer-0 weights: W0 = emb @ w_ih0
#   * per layer: W_cat = [w_in ; w_hh]  ([I_l + H, 4H]), bf16
#   * gate columns permuted from PyTorch (i,f,g,o) -> kernel layout (i,f,o,g)
#   * bias folded: b = b_ih + b_hh, f32
# ---------------------------------------------------------------------------
def _permute_gate_cols(w, hid):
    # (i, f, g, o) columns -> (i, f, o, g)
    return jnp.concatenate(
        [w[..., : 2 * hid], w[..., 3 * hid: 4 * hid], w[..., 2 * hid: 3 * hid]],
        axis=-1,
    )


def init_decoder_params(key, n_tokens, emb_dim, hid_dim, n_layers):
    ks = jax.random.split(key, 4 * n_layers + 3)
    k = 1.0 / jnp.sqrt(jnp.float32(hid_dim))
    emb = jax.random.normal(ks[0], (n_tokens, emb_dim), jnp.float32)

    layers = []
    idx = 1
    for l in range(n_layers):
        in_dim = emb_dim if l == 0 else hid_dim
        w_ih = jax.random.uniform(ks[idx + 0], (in_dim, 4 * hid_dim), jnp.float32, -k, k)
        w_hh = jax.random.uniform(ks[idx + 1], (hid_dim, 4 * hid_dim), jnp.float32, -k, k)
        b_ih = jax.random.uniform(ks[idx + 2], (1, 4 * hid_dim), jnp.float32, -k, k)
        b_hh = jax.random.uniform(ks[idx + 3], (1, 4 * hid_dim), jnp.float32, -k, k)
        idx += 4
        if l == 0:
            w_in = emb @ w_ih                       # fold embedding: [V, 4H]
        else:
            w_in = w_ih                             # [H, 4H]
        w_cat = jnp.concatenate([w_in, w_hh], axis=0)
        w_cat = _permute_gate_cols(w_cat, hid_dim).astype(jnp.bfloat16)
        b = _permute_gate_cols(b_ih + b_hh, hid_dim)  # f32
        layers.append({"w_cat": w_cat, "b": b})

    params = {"lstm": layers}
    params["fc_w"] = jax.random.uniform(
        ks[idx], (hid_dim, n_tokens), jnp.float32, -k, k).astype(jnp.bfloat16)
    params["fc_b"] = jax.random.uniform(ks[idx + 1], (1, n_tokens), jnp.float32, -k, k)
    return params


# ---------------------------------------------------------------------------
# Pure-JAX f32 reference (unfused, same params) for correctness checking
# ---------------------------------------------------------------------------
def decoder_forward_ref(params, tokens, hidden):
    h0, c0 = hidden
    n_layers, _, H = h0.shape
    V = params["fc_b"].shape[-1]
    h_new, c_new = [], []
    x = None
    for l, lyr in enumerate(params["lstm"]):
        W = lyr["w_cat"].astype(jnp.float32)
        b = lyr["b"]
        if l == 0:
            gates = W[:V][tokens] + h0[l] @ W[V:] + b       # folded emb lookup
        else:
            gates = x @ W[:H] + h0[l] @ W[H:] + b
        i_g = jax.nn.sigmoid(gates[:, 0:H])
        f_g = jax.nn.sigmoid(gates[:, H:2 * H])
        o_g = jax.nn.sigmoid(gates[:, 2 * H:3 * H])
        g_g = jnp.tanh(gates[:, 3 * H:])
        c_l = f_g * c0[l] + i_g * g_g
        h_l = o_g * jnp.tanh(c_l)
        h_new.append(h_l)
        c_new.append(c_l)
        x = h_l
    pred = x @ params["fc_w"].astype(jnp.float32) + params["fc_b"]
    return pred, (jnp.stack(h_new), jnp.stack(c_new))


# ---------------------------------------------------------------------------
if __name__ == "__main__":
    # Small but hardware-aligned shapes: B multiple of 8 sublanes, H / vocab = 128
    # lanes.  (For throughput, raise B toward 128/256 to fill MXU rows.)
    N_TOKENS, EMB_DIM, HID_DIM, N_LAYERS = 128, 32, 128, 2
    BATCH = 8

    key = jax.random.PRNGKey(0)
    k_par, k_tok, k_h, k_c = jax.random.split(key, 4)

    params = init_decoder_params(k_par, N_TOKENS, EMB_DIM, HID_DIM, N_LAYERS)
    tokens = jax.random.randint(k_tok, (BATCH,), 0, N_TOKENS, jnp.int32)
    h0 = jax.random.normal(k_h, (N_LAYERS, BATCH, HID_DIM), jnp.float32)
    c0 = jax.random.normal(k_c, (N_LAYERS, BATCH, HID_DIM), jnp.float32)

    # Reference first (f32, unfused math on the same parameters).
    pred_ref, (h_ref, c_ref) = decoder_forward_ref(params, tokens, (h0, c0))

    fwd = jax.jit(decoder_forward)
    pred, (h_new, c_new) = fwd(params, tokens, (h0, c0))
    pred, h_new, c_new = jax.block_until_ready((pred, h_new, c_new))

    assert pred.shape == (BATCH, N_TOKENS), pred.shape
    assert h_new.shape == (N_LAYERS, BATCH, HID_DIM), h_new.shape
    assert c_new.shape == (N_LAYERS, BATCH, HID_DIM), c_new.shape
    assert pred.dtype == jnp.float32
    assert bool(jnp.all(jnp.isfinite(pred)))

    # bf16 weights/activations in the MXU dots -> slightly looser tolerance.
    assert bool(jnp.allclose(pred, pred_ref, atol=2e-2, rtol=2e-2))
    assert bool(jnp.allclose(h_new, h_ref, atol=2e-2, rtol=2e-2))
    assert bool(jnp.allclose(c_new, c_ref, atol=2e-2, rtol=2e-2))

    print("KERNEL_OK")
</pallas_src>

<mosaic_0001>
module attributes {stable_mosaic.version = 11 : i64} {
  func.func @kernel(%arg0: memref<8xi32, #tpu.memory_space<smem>>, %arg1: memref<2x8x128xf32, #tpu.memory_space<vmem>>, %arg2: memref<2x8x128xf32, #tpu.memory_space<vmem>>, %arg3: memref<256x512xbf16, #tpu.memory_space<vmem>>, %arg4: memref<1x512xf32, #tpu.memory_space<vmem>>, %arg5: memref<256x512xbf16, #tpu.memory_space<vmem>>, %arg6: memref<1x512xf32, #tpu.memory_space<vmem>>, %arg7: memref<128x128xbf16, #tpu.memory_space<vmem>>, %arg8: memref<1x128xf32, #tpu.memory_space<vmem>>, %arg9: memref<8x128xf32, #tpu.memory_space<vmem>>, %arg10: memref<2x8x128xf32, #tpu.memory_space<vmem>>, %arg11: memref<2x8x128xf32, #tpu.memory_space<vmem>>) attributes {dimension_semantics = [], scalar_prefetch = 0 : i64, scratch_operands = 0 : i64, tpu.core_type = #tpu.core_type<tc>} {
    %0 = tpu.iota {dimensions = array<i32: 1>} : vector<8x128xi32>
    %1 = tpu.iota {dimensions = array<i32: 0>} : vector<8x128xi32>
    %c0_i32 = arith.constant 0 : i32
    %2 = vector.broadcast %c0_i32 : i32 to vector<8x128xi32>
    %c0_i32_0 = arith.constant 0 : i32
    %3 = vector.broadcast %c0_i32_0 : i32 to vector<8x128xi32>
    %4 = arith.cmpi eq, %1, %3 : vector<8x128xi32>
    %c0 = arith.constant 0 : index
    %5 = memref.load %arg0[%c0] : memref<8xi32, #tpu.memory_space<smem>>
    %6 = vector.broadcast %5 : i32 to vector<8x128xi32>
    %7 = arith.select %4, %6, %2 : vector<8x128xi1>, vector<8x128xi32>
    %c1_i32 = arith.constant 1 : i32
    %8 = vector.broadcast %c1_i32 : i32 to vector<8x128xi32>
    %9 = arith.cmpi eq, %1, %8 : vector<8x128xi32>
    %c1 = arith.constant 1 : index
    %10 = memref.load %arg0[%c1] : memref<8xi32, #tpu.memory_space<smem>>
    %11 = vector.broadcast %10 : i32 to vector<8x128xi32>
    %12 = arith.select %9, %11, %7 : vector<8x128xi1>, vector<8x128xi32>
    %c2_i32 = arith.constant 2 : i32
    %13 = vector.broadcast %c2_i32 : i32 to vector<8x128xi32>
    %14 = arith.cmpi eq, %1, %13 : vector<8x128xi32>
    %c2 = arith.constant 2 : index
    %15 = memref.load %arg0[%c2] : memref<8xi32, #tpu.memory_space<smem>>
    %16 = vector.broadcast %15 : i32 to vector<8x128xi32>
    %17 = arith.select %14, %16, %12 : vector<8x128xi1>, vector<8x128xi32>
    %c3_i32 = arith.constant 3 : i32
    %18 = vector.broadcast %c3_i32 : i32 to vector<8x128xi32>
    %19 = arith.cmpi eq, %1, %18 : vector<8x128xi32>
    %c3 = arith.constant 3 : index
    %20 = memref.load %arg0[%c3] : memref<8xi32, #tpu.memory_space<smem>>
    %21 = vector.broadcast %20 : i32 to vector<8x128xi32>
    %22 = arith.select %19, %21, %17 : vector<8x128xi1>, vector<8x128xi32>
    %c4_i32 = arith.constant 4 : i32
    %23 = vector.broadcast %c4_i32 : i32 to vector<8x128xi32>
    %24 = arith.cmpi eq, %1, %23 : vector<8x128xi32>
    %c4 = arith.constant 4 : index
    %25 = memref.load %arg0[%c4] : memref<8xi32, #tpu.memory_space<smem>>
    %26 = vector.broadcast %25 : i32 to vector<8x128xi32>
    %27 = arith.select %24, %26, %22 : vector<8x128xi1>, vector<8x128xi32>
    %c5_i32 = arith.constant 5 : i32
    %28 = vector.broadcast %c5_i32 : i32 to vector<8x128xi32>
    %29 = arith.cmpi eq, %1, %28 : vector<8x128xi32>
    %c5 = arith.constant 5 : index
    %30 = memref.load %arg0[%c5] : memref<8xi32, #tpu.memory_space<smem>>
    %31 = vector.broadcast %30 : i32 to vector<8x128xi32>
    %32 = arith.select %29, %31, %27 : vector<8x128xi1>, vector<8x128xi32>
    %c6_i32 = arith.constant 6 : i32
    %33 = vector.broadcast %c6_i32 : i32 to vector<8x128xi32>
    %34 = arith.cmpi eq, %1, %33 : vector<8x128xi32>
    %c6 = arith.constant 6 : index
    %35 = memref.load %arg0[%c6] : memref<8xi32, #tpu.memory_space<smem>>
    %36 = vector.broadcast %35 : i32 to vector<8x128xi32>
    %37 = arith.select %34, %36, %32 : vector<8x128xi1>, vector<8x128xi32>
    %c7_i32 = arith.constant 7 : i32
    %38 = vector.broadcast %c7_i32 : i32 to vector<8x128xi32>
    %39 = arith.cmpi eq, %1, %38 : vector<8x128xi32>
    %c7 = arith.constant 7 : index
    %40 = memref.load %arg0[%c7] : memref<8xi32, #tpu.memory_space<smem>>
    %41 = vector.broadcast %40 : i32 to vector<8x128xi32>
    %42 = arith.select %39, %41, %37 : vector<8x128xi1>, vector<8x128xi32>
    %43 = arith.cmpi eq, %0, %42 : vector<8x128xi32>
    %44 = arith.extui %43 : vector<8x128xi1> to vector<8x128xi32>
    %45 = arith.sitofp %44 : vector<8x128xi32> to vector<8x128xf32>
    %c0_1 = arith.constant 0 : index
    %c0_2 = arith.constant 0 : index
    %46 = vector.load %arg3[%c0_1, %c0_2] : memref<256x512xbf16, #tpu.memory_space<vmem>>, vector<256x512xbf16>
    %c0_3 = arith.constant 0 : index
    %c0_4 = arith.constant 0 : index
    %47 = vector.load %arg4[%c0_3, %c0_4] : memref<1x512xf32, #tpu.memory_space<vmem>>, vector<1x512xf32>
    %c0_5 = arith.constant 0 : index
    %c0_6 = arith.constant 0 : index
    %c0_7 = arith.constant 0 : index
    %48 = vector.load %arg1[%c0_5, %c0_6, %c0_7] : memref<2x8x128xf32, #tpu.memory_space<vmem>>, vector<1x8x128xf32>
    %49 = vector.shape_cast %48 : vector<1x8x128xf32> to vector<8x128xf32>
    %c0_8 = arith.constant 0 : index
    %c0_9 = arith.constant 0 : index
    %c0_10 = arith.constant 0 : index
    %50 = vector.load %arg2[%c0_8, %c0_9, %c0_10] : memref<2x8x128xf32, #tpu.memory_space<vmem>>, vector<1x8x128xf32>
    %51 = vector.shape_cast %50 : vector<1x8x128xf32> to vector<8x128xf32>
    %52 = tpu.concatenate %45, %49 in 1 : vector<8x128xf32>, vector<8x128xf32> -> vector<8x256xf32>
    %53 = arith.truncf %52 : vector<8x256xf32> to vector<8x256xbf16>
    %cst = arith.constant dense<0.000000e+00> : vector<8x512xf32>
    %54 = tpu.matmul %53, %46, %cst {dimension_numbers = #tpu.dot_dimension_numbers<[1], [0], [0], [1], [0, 0, 1, 1], [], []>} : vector<8x256xbf16>, vector<256x512xbf16>, vector<8x512xf32> -> vector<8x512xf32>
    %55 = vector.broadcast %47 : vector<1x512xf32> to vector<8x512xf32>
    %56 = arith.addf %54, %55 : vector<8x512xf32>
    %57 = vector.extract_strided_slice %56 {offsets = [0, 0], sizes = [8, 384], strides = [1, 1]} : vector<8x512xf32> to vector<8x384xf32>
    %58 = arith.negf %57 : vector<8x384xf32>
    %59 = math.exp %58 : vector<8x384xf32>
    %cst_11 = arith.constant 1.000000e+00 : f32
    %60 = vector.broadcast %cst_11 : f32 to vector<8x384xf32>
    %61 = arith.addf %60, %59 : vector<8x384xf32>
    %62 = arith.divf %60, %61 : vector<8x384xf32>
    %63 = vector.extract_strided_slice %56 {offsets = [0, 384], sizes = [8, 128], strides = [1, 1]} : vector<8x512xf32> to vector<8x128xf32>
    %64 = math.tanh %63 : vector<8x128xf32>
    %65 = vector.extract_strided_slice %62 {offsets = [0, 0], sizes = [8, 128], strides = [1, 1]} : vector<8x384xf32> to vector<8x128xf32>
    %66 = vector.extract_strided_slice %62 {offsets = [0, 128], sizes = [8, 128], strides = [1, 1]} : vector<8x384xf32> to vector<8x128xf32>
    %67 = vector.extract_strided_slice %62 {offsets = [0, 256], sizes = [8, 128], strides = [1, 1]} : vector<8x384xf32> to vector<8x128xf32>
    %68 = arith.mulf %66, %51 : vector<8x128xf32>
    %69 = arith.mulf %65, %64 : vector<8x128xf32>
    %70 = arith.addf %68, %69 : vector<8x128xf32>
    %71 = math.tanh %70 : vector<8x128xf32>
    %72 = arith.mulf %67, %71 : vector<8x128xf32>
    %c0_12 = arith.constant 0 : index
    %c0_13 = arith.constant 0 : index
    %c0_14 = arith.constant 0 : index
    %73 = vector.load %arg10[%c0_12, %c0_13, %c0_14] : memref<2x8x128xf32, #tpu.memory_space<vmem>>, vector<1x8x128xf32>
    %74 = vector.shape_cast %73 : vector<1x8x128xf32> to vector<8x128xf32>
    %75 = vector.shape_cast %72 : vector<8x128xf32> to vector<1x8x128xf32>
    tpu.vector_store %arg10[%c0_12, %c0_13, %c0_14], %75 {strides = array<i32>} : memref<2x8x128xf32, #tpu.memory_space<vmem>>, vector<1x8x128xf32>,
    %c0_15 = arith.constant 0 : index
    %c0_16 = arith.constant 0 : index
    %c0_17 = arith.constant 0 : index
    %76 = vector.load %arg11[%c0_15, %c0_16, %c0_17] : memref<2x8x128xf32, #tpu.memory_space<vmem>>, vector<1x8x128xf32>
    %77 = vector.shape_cast %76 : vector<1x8x128xf32> to vector<8x128xf32>
    %78 = vector.shape_cast %70 : vector<8x128xf32> to vector<1x8x128xf32>
    tpu.vector_store %arg11[%c0_15, %c0_16, %c0_17], %78 {strides = array<i32>} : memref<2x8x128xf32, #tpu.memory_space<vmem>>, vector<1x8x128xf32>,
    %c0_18 = arith.constant 0 : index
    %c0_19 = arith.constant 0 : index
    %79 = vector.load %arg5[%c0_18, %c0_19] : memref<256x512xbf16, #tpu.memory_space<vmem>>, vector<256x512xbf16>
    %c0_20 = arith.constant 0 : index
    %c0_21 = arith.constant 0 : index
    %80 = vector.load %arg6[%c0_20, %c0_21] : memref<1x512xf32, #tpu.memory_space<vmem>>, vector<1x512xf32>
    %c1_22 = arith.constant 1 : index
    %c0_23 = arith.constant 0 : index
    %c0_24 = arith.constant 0 : index
    %81 = vector.load %arg1[%c1_22, %c0_23, %c0_24] : memref<2x8x128xf32, #tpu.memory_space<vmem>>, vector<1x8x128xf32>
    %82 = vector.shape_cast %81 : vector<1x8x128xf32> to vector<8x128xf32>
    %c1_25 = arith.constant 1 : index
    %c0_26 = arith.constant 0 : index
    %c0_27 = arith.constant 0 : index
    %83 = vector.load %arg2[%c1_25, %c0_26, %c0_27] : memref<2x8x128xf32, #tpu.memory_space<vmem>>, vector<1x8x128xf32>
    %84 = vector.shape_cast %83 : vector<1x8x128xf32> to vector<8x128xf32>
    %85 = tpu.concatenate %72, %82 in 1 : vector<8x128xf32>, vector<8x128xf32> -> vector<8x256xf32>
    %86 = arith.truncf %85 : vector<8x256xf32> to vector<8x256xbf16>
    %cst_28 = arith.constant dense<0.000000e+00> : vector<8x512xf32>
    %87 = tpu.matmul %86, %79, %cst_28 {dimension_numbers = #tpu.dot_dimension_numbers<[1], [0], [0], [1], [0, 0, 1, 1], [], []>} : vector<8x256xbf16>, vector<256x512xbf16>, vector<8x512xf32> -> vector<8x512xf32>
    %88 = vector.broadcast %80 : vector<1x512xf32> to vector<8x512xf32>
    %89 = arith.addf %87, %88 : vector<8x512xf32>
    %90 = vector.extract_strided_slice %89 {offsets = [0, 0], sizes = [8, 384], strides = [1, 1]} : vector<8x512xf32> to vector<8x384xf32>
    %91 = arith.negf %90 : vector<8x384xf32>
    %92 = math.exp %91 : vector<8x384xf32>
    %cst_29 = arith.constant 1.000000e+00 : f32
    %93 = vector.broadcast %cst_29 : f32 to vector<8x384xf32>
    %94 = arith.addf %93, %92 : vector<8x384xf32>
    %95 = arith.divf %93, %94 : vector<8x384xf32>
    %96 = vector.extract_strided_slice %89 {offsets = [0, 384], sizes = [8, 128], strides = [1, 1]} : vector<8x512xf32> to vector<8x128xf32>
    %97 = math.tanh %96 : vector<8x128xf32>
    %98 = vector.extract_strided_slice %95 {offsets = [0, 0], sizes = [8, 128], strides = [1, 1]} : vector<8x384xf32> to vector<8x128xf32>
    %99 = vector.extract_strided_slice %95 {offsets = [0, 128], sizes = [8, 128], strides = [1, 1]} : vector<8x384xf32> to vector<8x128xf32>
    %100 = vector.extract_strided_slice %95 {offsets = [0, 256], sizes = [8, 128], strides = [1, 1]} : vector<8x384xf32> to vector<8x128xf32>
    %101 = arith.mulf %99, %84 : vector<8x128xf32>
    %102 = arith.mulf %98, %97 : vector<8x128xf32>
    %103 = arith.addf %101, %102 : vector<8x128xf32>
    %104 = math.tanh %103 : vector<8x128xf32>
    %105 = arith.mulf %100, %104 : vector<8x128xf32>
    %c1_30 = arith.constant 1 : index
    %c0_31 = arith.constant 0 : index
    %c0_32 = arith.constant 0 : index
    %106 = vector.load %arg10[%c1_30, %c0_31, %c0_32] : memref<2x8x128xf32, #tpu.memory_space<vmem>>, vector<1x8x128xf32>
    %107 = vector.shape_cast %106 : vector<1x8x128xf32> to vector<8x128xf32>
    %108 = vector.shape_cast %105 : vector<8x128xf32> to vector<1x8x128xf32>
    tpu.vector_store %arg10[%c1_30, %c0_31, %c0_32], %108 {strides = array<i32>} : memref<2x8x128xf32, #tpu.memory_space<vmem>>, vector<1x8x128xf32>,
    %c1_33 = arith.constant 1 : index
    %c0_34 = arith.constant 0 : index
    %c0_35 = arith.constant 0 : index
    %109 = vector.load %arg11[%c1_33, %c0_34, %c0_35] : memref<2x8x128xf32, #tpu.memory_space<vmem>>, vector<1x8x128xf32>
    %110 = vector.shape_cast %109 : vector<1x8x128xf32> to vector<8x128xf32>
    %111 = vector.shape_cast %103 : vector<8x128xf32> to vector<1x8x128xf32>
    tpu.vector_store %arg11[%c1_33, %c0_34, %c0_35], %111 {strides = array<i32>} : memref<2x8x128xf32, #tpu.memory_space<vmem>>, vector<1x8x128xf32>,
    %112 = arith.truncf %105 : vector<8x128xf32> to vector<8x128xbf16>
    %c0_36 = arith.constant 0 : index
    %c0_37 = arith.constant 0 : index
    %113 = vector.load %arg7[%c0_36, %c0_37] : memref<128x128xbf16, #tpu.memory_space<vmem>>, vector<128x128xbf16>
    %cst_38 = arith.constant dense<0.000000e+00> : vector<8x128xf32>
    %114 = tpu.matmul %112, %113, %cst_38 {dimension_numbers = #tpu.dot_dimension_numbers<[1], [0], [0], [1], [0, 0, 1, 1], [], []>} : vector<8x128xbf16>, vector<128x128xbf16>, vector<8x128xf32> -> vector<8x128xf32>
    %c0_39 = arith.constant 0 : index
    %c0_40 = arith.constant 0 : index
    %115 = vector.load %arg8[%c0_39, %c0_40] : memref<1x128xf32, #tpu.memory_space<vmem>>, vector<1x128xf32>
    %116 = vector.broadcast %115 : vector<1x128xf32> to vector<8x128xf32>
    %117 = arith.addf %114, %116 : vector<8x128xf32>
    %c0_41 = arith.constant 0 : index
    %c0_42 = arith.constant 0 : index
    %118 = vector.load %arg9[%c0_41, %c0_42] : memref<8x128xf32, #tpu.memory_space<vmem>>, vector<8x128xf32>
    tpu.vector_store %arg9[%c0_41, %c0_42], %117 {strides = array<i32>} : memref<8x128xf32, #tpu.memory_space<vmem>>, vector<8x128xf32>,
    return
  }
}

</mosaic_0001>

<llo_original>
// kernel: decoder_forward.1
$region0: #{decoder_forward.1}
  #allocation0 [shape = 'u32[]', space=smem, size = 0x4, offset = 0x4, fixed_abs, tag = 'smem constant byte address 0x4 - core index']
  #allocation1 [shape = 'u32[144,128]{1,0:T(1,128)}', space=vmem, size = 0x12000, scoped, tag = 'internal scratch']
  %s0 = inlined_call_operand.vmem [shape: s32[8], index: 0, kind: input, shape index: {}]
  %s1 = inlined_call_operand.hbm [shape: f32[2,8,128], index: 1, kind: input, shape index: {}, may-alias: {1,10}]
  %s2 = inlined_call_operand.hbm [shape: f32[2,8,128], index: 2, kind: input, shape index: {}, may-alias: {2,11}]
  %s3 = inlined_call_operand.hbm [shape: bf16[256,512], index: 3, kind: input, shape index: {}]
  %s4 = inlined_call_operand.vmem [shape: f32[1,512], index: 4, kind: input, shape index: {}]
  %s5 = inlined_call_operand.hbm [shape: bf16[256,512], index: 5, kind: input, shape index: {}]
  %s6 = inlined_call_operand.vmem [shape: f32[1,512], index: 6, kind: input, shape index: {}]
  %s7 = inlined_call_operand.vmem [shape: bf16[128,128], index: 7, kind: input, shape index: {}]
  %s8 = inlined_call_operand.vmem [shape: f32[1,128], index: 8, kind: input, shape index: {}]
  %s9 = inlined_call_operand.hbm [shape: f32[8,128], index: 9, kind: output, shape index: {0}]
  %s10 = inlined_call_operand.hbm [shape: f32[2,8,128], index: 10, kind: output, shape index: {1}, may-alias: {1,10}]
  %s11 = inlined_call_operand.hbm [shape: f32[2,8,128], index: 11, kind: output, shape index: {2}, may-alias: {2,11}]
  %12 = xla_tuple %s9, %s10, %s11
  %s13 = sld [smem:[#allocation0]]
  $region82: #{decoder_forward.1} parent=0
    _
  %s15 = ssub.s32 1, %s13
  %s16 = scalar_select 0, %s15, %s13
  $region1: #{decoder_forward.1} parent=0
    #allocation2 [shape = 'u8[512]{0}', space=smem, size = 0x200, scoped, tag = 'input window, operand 0, single buffered']
    #allocation3 [shape = 's32[1]{0}', space=sflag, size = 0x4, scoped, tag = 'scoped memory for decoder_forward.1']
    #allocation4 [shape = 's32[1]{0}', space=sflag, size = 0x4, scoped, tag = 'scoped memory for decoder_forward.1']
    #allocation5 [shape = 's32[1]{0}', space=sflag, size = 0x4, scoped, tag = 'scoped memory for decoder_forward.1']
    #allocation6 [shape = 'u8[8192]{0}', space=vmem, size = 0x2000, scoped, tag = 'input window, operand 1, single buffered']
    #allocation7 [shape = 'u8[8192]{0}', space=vmem, size = 0x2000, scoped, tag = 'input window, operand 2, single buffered']
    #allocation8 [shape = 's32[1]{0}', space=sflag, size = 0x4, scoped, tag = 'scoped memory for decoder_forward.1']
    #allocation9 [shape = 'u8[262144]{0}', space=vmem, size = 0x40000, scoped, tag = 'input window, operand 3, single buffered']
    #allocation10 [shape = 'u8[262144]{0}', space=vmem, size = 0x40000, scoped, tag = 'input window, operand 5, single buffered']
    #allocation11 [shape = 's32[1]{0}', space=sflag, size = 0x4, scoped, tag = 'scoped memory for decoder_forward.1']
    #allocation12 [shape = 'u8[4096]{0}', space=vmem, size = 0x1000, scoped, tag = 'output window, operand 0, single buffered']
    #allocation13 [shape = 'u8[8192]{0}', space=vmem, size = 0x2000, scoped, tag = 'output window, operand 1, single buffered']
    #allocation14 [shape = 's32[1]{0}', space=sflag, size = 0x4, scoped, tag = 'scoped memory for decoder_forward.1']
    #allocation15 [shape = 'u8[8192]{0}', space=vmem, size = 0x2000, scoped, tag = 'output window, operand 2, single buffered']
    %17 = vsyncpa [#allocation5], 0
    %18 = vsyncpa [#allocation3], 0
    %19 = vsyncpa [#allocation8], 0
    %20 = vsyncpa [#allocation11], 0
    %21 = vsyncpa [#allocation4], 0
    %22 = vsyncpa [#allocation14], 0
    // Predicated region
    $region2: #{decoder_forward.1} parent=1 // pred_check
      _
    $region3: #{decoder_forward.1} parent=1 // pred_check_branch
      %24 = sbr.rel (0) target = $region5
    $region4: #{decoder_forward.1} parent=1 // pred_region
      %s26 = ssub.s32 16, 16
      %27 = vsyncadd [#allocation5], %s26
      %s29 = sshll.u32 %s0, 4
      %s30 = int_to_ptr.vmem [resolvable:$true] %s29
      %32 = dma.vmem_to_smem %s30, 16, [#allocation2], [#allocation5]
    $region5: #{decoder_forward.1} parent=1 // pred_fallthru
      _
    // Predicated region
    $region6: #{decoder_forward.1} parent=1 // pred_check
      _
    $region7: #{decoder_forward.1} parent=1 // pred_check_branch
      %34 = sbr.rel (0) target = $region9
    $region8: #{decoder_forward.1} parent=1 // pred_region
      %s36 = ssub.s32 256, 256
      %37 = vsyncadd [#allocation3], %s36
      %s38 = sshll.u32 [#allocation6], 4
      %s39 = int_to_ptr.vmem [resolvable:$true] %s38
      %44 = dma.hbm_to_vmem [thread:$0]  %s1, 256, %s39, [#allocation3], 128, 128, 8
    $region9: #{decoder_forward.1} parent=1 // pred_fallthru
      _
    // Predicated region
    $region10: #{decoder_forward.1} parent=1 // pred_check
      _
    $region11: #{decoder_forward.1} parent=1 // pred_check_branch
      %46 = sbr.rel (0) target = $region13
    $region12: #{decoder_forward.1} parent=1 // pred_region
      %s48 = ssub.s32 256, 256
      %49 = vsyncadd [#allocation8], %s48
      %s50 = sshll.u32 [#allocation7], 4
      %s51 = int_to_ptr.vmem [resolvable:$true] %s50
      %56 = dma.hbm_to_vmem [thread:$0]  %s2, 256, %s51, [#allocation8], 128, 128, 8
    $region13: #{decoder_forward.1} parent=1 // pred_fallthru
      _
    // Predicated region
    $region14: #{decoder_forward.1} parent=1 // pred_check
      _
    $region15: #{decoder_forward.1} parent=1 // pred_check_branch
      %58 = sbr.rel (0) target = $region17
    $region16: #{decoder_forward.1} parent=1 // pred_region
      %s60 = ssub.s32 8192, 8192
      %61 = vsyncadd [#allocation8], %s60
      %s62 = sshll.u32 [#allocation9], 4
      %s63 = int_to_ptr.vmem [resolvable:$true] %s62
      %68 = dma.hbm_to_vmem [thread:$0]  %s3, 8192, %s63, [#allocation8], 256, 256, 16
    $region17: #{decoder_forward.1} parent=1 // pred_fallthru
      _
    // Predicated region
    $region18: #{decoder_forward.1} parent=1 // pred_check
      _
    $region19: #{decoder_forward.1} parent=1 // pred_check_branch
      %70 = sbr.rel (0) target = $region21
    $region20: #{decoder_forward.1} parent=1 // pred_region
      _
    $region21: #{decoder_forward.1} parent=1 // pred_fallthru
      _
    // Predicated region
    $region22: #{decoder_forward.1} parent=1 // pred_check
      _
    $region23: #{decoder_forward.1} parent=1 // pred_check_branch
      %72 = sbr.rel (0) target = $region25
    $region24: #{decoder_forward.1} parent=1 // pred_region
      %s74 = ssub.s32 8192, 8192
      %75 = vsyncadd [#allocation11], %s74
      %s76 = sshll.u32 [#allocation10], 4
      %s77 = int_to_ptr.vmem [resolvable:$true] %s76
      %82 = dma.hbm_to_vmem [thread:$0]  %s5, 8192, %s77, [#allocation11], 256, 256, 16
    $region25: #{decoder_forward.1} parent=1 // pred_fallthru
      _
    // Predicated region
    $region26: #{decoder_forward.1} parent=1 // pred_check
      _
    $region27: #{decoder_forward.1} parent=1 // pred_check_branch
      %84 = sbr.rel (0) target = $region29
    $region28: #{decoder_forward.1} parent=1 // pred_region
      _
    $region29: #{decoder_forward.1} parent=1 // pred_fallthru
      _
    // Predicated region
    $region30: #{decoder_forward.1} parent=1 // pred_check
      _
    $region31: #{decoder_forward.1} parent=1 // pred_check_branch
      %86 = sbr.rel (0) target = $region33
    $region32: #{decoder_forward.1} parent=1 // pred_region
      _
    $region33: #{decoder_forward.1} parent=1 // pred_fallthru
      _
    // Predicated region
    $region34: #{decoder_forward.1} parent=1 // pred_check
      _
    $region35: #{decoder_forward.1} parent=1 // pred_check_branch
      %88 = sbr.rel (0) target = $region37
    $region36: #{decoder_forward.1} parent=1 // pred_region
      _
    $region37: #{decoder_forward.1} parent=1 // pred_fallthru
      _
    // Predicated region
    $region38: #{decoder_forward.1} parent=1 // pred_check
      _
    $region39: #{decoder_forward.1} parent=1 // pred_check_branch
      %90 = sbr.rel (0) target = $region41
    $region40: #{decoder_forward.1} parent=1 // pred_region
      %91 = dma.done [#allocation5], 16
    $region41: #{decoder_forward.1} parent=1 // pred_fallthru
      _
    // Predicated region
    $region42: #{decoder_forward.1} parent=1 // pred_check
      _
    $region43: #{decoder_forward.1} parent=1 // pred_check_branch
      %93 = sbr.rel (0) target = $region45
    $region44: #{decoder_forward.1} parent=1 // pred_region
      %94 = dma.done [#allocation3], 256
    $region45: #{decoder_forward.1} parent=1 // pred_fallthru
      _
    // Predicated region
    $region46: #{decoder_forward.1} parent=1 // pred_check
      _
    $region47: #{decoder_forward.1} parent=1 // pred_check_branch
      %96 = sbr.rel (0) target = $region49
    $region48: #{decoder_forward.1} parent=1 // pred_region
      %97 = dma.done [#allocation8], 256
    $region49: #{decoder_forward.1} parent=1 // pred_fallthru
      _
    // Predicated region
    $region50: #{decoder_forward.1} parent=1 // pred_check
      _
    $region51: #{decoder_forward.1} parent=1 // pred_check_branch
      %99 = sbr.rel (0) target = $region53
    $region52: #{decoder_forward.1} parent=1 // pred_region
      %100 = dma.done [#allocation8], 8192
    $region53: #{decoder_forward.1} parent=1 // pred_fallthru
      _
    // Predicated region
    $region54: #{decoder_forward.1} parent=1 // pred_check
      _
    $region55: #{decoder_forward.1} parent=1 // pred_check_branch
      %102 = sbr.rel (0) target = $region57
    $region56: #{decoder_forward.1} parent=1 // pred_region
      %103 = dma.done [#allocation11], 8192
    $region57: #{decoder_forward.1} parent=1 // pred_fallthru
      _
    %104 = sfence
    %v106 = vlaneseq
    %v107 = vand.u32 %v106, 127
    %v108 = vlaneseq
    %v109 = vshrl.u32 %v108, 7
    %vm110 = vcmp.eq.s32.totalorder %v109, 0
    %s111 = sld [smem:[#allocation2]]
    %v112 = vstv %s111
    %v113 = vsel %vm110, %v112, 0
    %vm114 = vcmp.eq.s32.totalorder %v109, 1
    %s115 = sld [smem:[#allocation2 + $0x1]]
    %v116 = vstv %s115
    %v117 = vsel %vm114, %v116, %v113
    %vm118 = vcmp.eq.s32.totalorder %v109, 2
    %s119 = sld [smem:[#allocation2 + $0x2]]
    %v120 = vstv %s119
    %v121 = vsel %vm118, %v120, %v117
    %vm122 = vcmp.eq.s32.totalorder %v109, 3
    %s123 = sld [smem:[#allocation2 + $0x3]]
    %v124 = vstv %s123
    %v125 = vsel %vm122, %v124, %v121
    %vm126 = vcmp.eq.s32.totalorder %v109, 4
    %s127 = sld [smem:[#allocation2 + $0x4]]
    %v128 = vstv %s127
    %v129 = vsel %vm126, %v128, %v125
    %vm130 = vcmp.eq.s32.totalorder %v109, 5
    %s131 = sld [smem:[#allocation2 + $0x5]]
    %v132 = vstv %s131
    %v133 = vsel %vm130, %v132, %v129
    %vm134 = vcmp.eq.s32.totalorder %v109, 6
    %s135 = sld [smem:[#allocation2 + $0x6]]
    %v136 = vstv %s135
    %v137 = vsel %vm134, %v136, %v133
    %vm138 = vcmp.eq.s32.totalorder %v109, 7
    %s139 = sld [smem:[#allocation2 + $0x7]]
    %v140 = vstv %s139
    %v141 = vsel %vm138, %v140, %v137
    %vm142 = vcmp.eq.s32.totalorder %v107, %v141
    %v143 = vsel %vm142, 1, 0
    %v144 = vcvt.s32.f32 %v143
    %v145 = vld [vmem:[#allocation9] sm:$0xff]
    %v146 = vld [vmem:[#allocation9 + $0x8] sm:$0xff]
    %v147 = vld [vmem:[#allocation9 + $0x10] sm:$0xff]
    %v148 = vld [vmem:[#allocation9 + $0x18] sm:$0xff]
    %v149 = vld [vmem:[#allocation9 + $0x20] sm:$0xff]
    %v150 = vld [vmem:[#allocation9 + $0x28] sm:$0xff]
    %v151 = vld [vmem:[#allocation9 + $0x30] sm:$0xff]
    %v152 = vld [vmem:[#allocation9 + $0x38] sm:$0xff]
    %v153 = vld [vmem:[#allocation9 + $0x40] sm:$0xff]
    %v154 = vld [vmem:[#allocation9 + $0x48] sm:$0xff]
    %v155 = vld [vmem:[#allocation9 + $0x50] sm:$0xff]
    %v156 = vld [vmem:[#allocation9 + $0x58] sm:$0xff]
    %v157 = vld [vmem:[#allocation9 + $0x60] sm:$0xff]
    %v158 = vld [vmem:[#allocation9 + $0x68] sm:$0xff]
    %v159 = vld [vmem:[#allocation9 + $0x70] sm:$0xff]
    %v160 = vld [vmem:[#allocation9 + $0x78] sm:$0xff]
    %v161 = vld [vmem:[#allocation9 + $0x80] sm:$0xff]
    %v162 = vld [vmem:[#allocation9 + $0x88] sm:$0xff]
    %v163 = vld [vmem:[#allocation9 + $0x90] sm:$0xff]
    %v164 = vld [vmem:[#allocation9 + $0x98] sm:$0xff]
    %v165 = vld [vmem:[#allocation9 + $0xa0] sm:$0xff]
    %v166 = vld [vmem:[#allocation9 + $0xa8] sm:$0xff]
    %v167 = vld [vmem:[#allocation9 + $0xb0] sm:$0xff]
    %v168 = vld [vmem:[#allocation9 + $0xb8] sm:$0xff]
    %v169 = vld [vmem:[#allocation9 + $0xc0] sm:$0xff]
    %v170 = vld [vmem:[#allocation9 + $0xc8] sm:$0xff]
    %v171 = vld [vmem:[#allocation9 + $0xd0] sm:$0xff]
    %v172 = vld [vmem:[#allocation9 + $0xd8] sm:$0xff]
    %v173 = vld [vmem:[#allocation9 + $0xe0] sm:$0xff]
    %v174 = vld [vmem:[#allocation9 + $0xe8] sm:$0xff]
    %v175 = vld [vmem:[#allocation9 + $0xf0] sm:$0xff]
    %v176 = vld [vmem:[#allocation9 + $0xf8] sm:$0xff]
    %v177 = vld [vmem:[#allocation9 + $0x100] sm:$0xff]
    %v178 = vld [vmem:[#allocation9 + $0x108] sm:$0xff]
    %v179 = vld [vmem:[#allocation9 + $0x110] sm:$0xff]
    %v180 = vld [vmem:[#allocation9 + $0x118] sm:$0xff]
    %v181 = vld [vmem:[#allocation9 + $0x120] sm:$0xff]
    %v182 = vld [vmem:[#allocation9 + $0x128] sm:$0xff]
    %v183 = vld [vmem:[#allocation9 + $0x130] sm:$0xff]
    %v184 = vld [vmem:[#allocation9 + $0x138] sm:$0xff]
    %v185 = vld [vmem:[#allocation9 + $0x140] sm:$0xff]
    %v186 = vld [vmem:[#allocation9 + $0x148] sm:$0xff]
    %v187 = vld [vmem:[#allocation9 + $0x150] sm:$0xff]
    %v188 = vld [vmem:[#allocation9 + $0x158] sm:$0xff]
    %v189 = vld [vmem:[#allocation9 + $0x160] sm:$0xff]
    %v190 = vld [vmem:[#allocation9 + $0x168] sm:$0xff]
    %v191 = vld [vmem:[#allocation9 + $0x170] sm:$0xff]
    %v192 = vld [vmem:[#allocation9 + $0x178] sm:$0xff]
    %v193 = vld [vmem:[#allocation9 + $0x180] sm:$0xff]
    %v194 = vld [vmem:[#allocation9 + $0x188] sm:$0xff]
    %v195 = vld [vmem:[#allocation9 + $0x190] sm:$0xff]
    %v196 = vld [vmem:[#allocation9 + $0x198] sm:$0xff]
    %v197 = vld [vmem:[#allocation9 + $0x1a0] sm:$0xff]
    %v198 = vld [vmem:[#allocation9 + $0x1a8] sm:$0xff]
    %v199 = vld [vmem:[#allocation9 + $0x1b0] sm:$0xff]
    %v200 = vld [vmem:[#allocation9 + $0x1b8] sm:$0xff]
    %v201 = vld [vmem:[#allocation9 + $0x1c0] sm:$0xff]
    %v202 = vld [vmem:[#allocation9 + $0x1c8] sm:$0xff]
    %v203 = vld [vmem:[#allocation9 + $0x1d0] sm:$0xff]
    %v204 = vld [vmem:[#allocation9 + $0x1d8] sm:$0xff]
    %v205 = vld [vmem:[#allocation9 + $0x1e0] sm:$0xff]
    %v206 = vld [vmem:[#allocation9 + $0x1e8] sm:$0xff]
    %v207 = vld [vmem:[#allocation9 + $0x1f0] sm:$0xff]
    %v208 = vld [vmem:[#allocation9 + $0x1f8] sm:$0xff]
    %v209 = vld [vmem:[%s4] sm:$0xf]
    %v210 = vld [vmem:[#allocation6] sm:$0xff]
    %v211 = vld [vmem:[#allocation7] sm:$0xff]
    %v212 = vpack.c.bf16 %v144, %v144
    %v213 = vpack.c.bf16 %v210, %v210
    %v215 = vlaneseq
    %v216 = vshrl.u32 %v215, 7
    %v217 = vsub.s32 0, %v216
    %v218 = vrot.slane %v209, %v217
    %v219 = vlaneseq
    %v220 = vshrl.u32 %v219, 7
    %v221 = vsub.s32 1, %v220
    %v222 = vrot.slane %v209, %v221
    %v223 = vlaneseq
    %v224 = vshrl.u32 %v223, 7
    %v225 = vsub.s32 2, %v224
    %v226 = vrot.slane %v209, %v225
    %v227 = vlaneseq
    %v228 = vshrl.u32 %v227, 7
    %v229 = vsub.s32 3, %v228
    %v230 = vrot.slane %v209, %v229
    %v299 = vunpack.c.l.b16 %v145
    %v300 = vunpack.c.h.b16 %v145
    %v301 = vunpack.c.l.b16 %v146
    %v302 = vunpack.c.h.b16 %v146
    %v303 = vunpack.c.l.b16 %v147
    %v304 = vunpack.c.h.b16 %v147
    %v305 = vunpack.c.l.b16 %v148
    %v306 = vunpack.c.h.b16 %v148
    %v307 = vunpack.c.l.b16 %v149
    %v308 = vunpack.c.h.b16 %v149
    %v309 = vunpack.c.l.b16 %v150
    %v310 = vunpack.c.h.b16 %v150
    %v311 = vunpack.c.l.b16 %v151
    %v312 = vunpack.c.h.b16 %v151
    %v313 = vunpack.c.l.b16 %v152
    %v314 = vunpack.c.h.b16 %v152
    %v315 = vunpack.c.l.b16 %v153
    %v316 = vunpack.c.h.b16 %v153
    %v317 = vunpack.c.l.b16 %v154
    %v318 = vunpack.c.h.b16 %v154
    %v319 = vunpack.c.l.b16 %v155
    %v320 = vunpack.c.h.b16 %v155
    %v321 = vunpack.c.l.b16 %v156
    %v322 = vunpack.c.h.b16 %v156
    %v323 = vunpack.c.l.b16 %v157
    %v324 = vunpack.c.h.b16 %v157
    %v325 = vunpack.c.l.b16 %v158
    %v326 = vunpack.c.h.b16 %v158
    %v327 = vunpack.c.l.b16 %v159
    %v328 = vunpack.c.h.b16 %v159
    %v329 = vunpack.c.l.b16 %v160
    %v330 = vunpack.c.h.b16 %v160
    %v331 = vunpack.c.l.b16 %v161
    %v332 = vunpack.c.h.b16 %v161
    %v333 = vunpack.c.l.b16 %v162
    %v334 = vunpack.c.h.b16 %v162
    %v335 = vunpack.c.l.b16 %v163
    %v336 = vunpack.c.h.b16 %v163
    %v337 = vunpack.c.l.b16 %v164
    %v338 = vunpack.c.h.b16 %v164
    %v339 = vunpack.c.l.b16 %v165
    %v340 = vunpack.c.h.b16 %v165
    %v341 = vunpack.c.l.b16 %v166
    %v342 = vunpack.c.h.b16 %v166
    %v343 = vunpack.c.l.b16 %v167
    %v344 = vunpack.c.h.b16 %v167
    %v345 = vunpack.c.l.b16 %v168
    %v346 = vunpack.c.h.b16 %v168
    %v347 = vunpack.c.l.b16 %v169
    %v348 = vunpack.c.h.b16 %v169
    %v349 = vunpack.c.l.b16 %v170
    %v350 = vunpack.c.h.b16 %v170
    %v351 = vunpack.c.l.b16 %v171
    %v352 = vunpack.c.h.b16 %v171
    %v353 = vunpack.c.l.b16 %v172
    %v354 = vunpack.c.h.b16 %v172
    %v355 = vunpack.c.l.b16 %v173
    %v356 = vunpack.c.h.b16 %v173
    %v357 = vunpack.c.l.b16 %v174
    %v358 = vunpack.c.h.b16 %v174
    %v359 = vunpack.c.l.b16 %v175
    %v360 = vunpack.c.h.b16 %v175
    %v361 = vunpack.c.l.b16 %v176
    %v362 = vunpack.c.h.b16 %v176
    %v363 = vunpack.c.l.b16 %v177
    %v364 = vunpack.c.h.b16 %v177
    %v365 = vunpack.c.l.b16 %v178
    %v366 = vunpack.c.h.b16 %v178
    %v367 = vunpack.c.l.b16 %v179
    %v368 = vunpack.c.h.b16 %v179
    %v369 = vunpack.c.l.b16 %v180
    %v370 = vunpack.c.h.b16 %v180
    %v371 = vunpack.c.l.b16 %v181
    %v372 = vunpack.c.h.b16 %v181
    %v373 = vunpack.c.l.b16 %v182
    %v374 = vunpack.c.h.b16 %v182
    %v375 = vunpack.c.l.b16 %v183
    %v376 = vunpack.c.h.b16 %v183
    %v377 = vunpack.c.l.b16 %v184
    %v378 = vunpack.c.h.b16 %v184
    %v379 = vunpack.c.l.b16 %v185
    %v380 = vunpack.c.h.b16 %v185
    %v381 = vunpack.c.l.b16 %v186
    %v382 = vunpack.c.h.b16 %v186
    %v383 = vunpack.c.l.b16 %v187
    %v384 = vunpack.c.h.b16 %v187
    %v385 = vunpack.c.l.b16 %v188
    %v386 = vunpack.c.h.b16 %v188
    %v387 = vunpack.c.l.b16 %v189
    %v388 = vunpack.c.h.b16 %v189
    %v389 = vunpack.c.l.b16 %v190
    %v390 = vunpack.c.h.b16 %v190
    %v391 = vunpack.c.l.b16 %v191
    %v392 = vunpack.c.h.b16 %v191
    %v393 = vunpack.c.l.b16 %v192
    %v394 = vunpack.c.h.b16 %v192
    %v395 = vunpack.c.l.b16 %v193
    %v396 = vunpack.c.h.b16 %v193
    %v397 = vunpack.c.l.b16 %v194
    %v398 = vunpack.c.h.b16 %v194
    %v399 = vunpack.c.l.b16 %v195
    %v400 = vunpack.c.h.b16 %v195
    %v401 = vunpack.c.l.b16 %v196
    %v402 = vunpack.c.h.b16 %v196
    %v403 = vunpack.c.l.b16 %v197
    %v404 = vunpack.c.h.b16 %v197
    %v405 = vunpack.c.l.b16 %v198
    %v406 = vunpack.c.h.b16 %v198
    %v407 = vunpack.c.l.b16 %v199
    %v408 = vunpack.c.h.b16 %v199
    %v409 = vunpack.c.l.b16 %v200
    %v410 = vunpack.c.h.b16 %v200
    %v411 = vunpack.c.l.b16 %v201
    %v412 = vunpack.c.h.b16 %v201
    %v413 = vunpack.c.l.b16 %v202
    %v414 = vunpack.c.h.b16 %v202
    %v415 = vunpack.c.l.b16 %v203
    %v416 = vunpack.c.h.b16 %v203
    %v417 = vunpack.c.l.b16 %v204
    %v418 = vunpack.c.h.b16 %v204
    %v419 = vunpack.c.l.b16 %v205
    %v420 = vunpack.c.h.b16 %v205
    %v421 = vunpack.c.l.b16 %v206
    %v422 = vunpack.c.h.b16 %v206
    %v423 = vunpack.c.l.b16 %v207
    %v424 = vunpack.c.h.b16 %v207
    %v425 = vunpack.c.l.b16 %v208
    %v426 = vunpack.c.h.b16 %v208
    %v427 = vpack.c.b16 %v303, %v299
    %v428 = vpack.c.b16 %v304, %v300
    %v429 = vpack.c.b16 %v305, %v301
    %v430 = vpack.c.b16 %v306, %v302
    %v431 = vpack.c.b16 %v311, %v307
    %v432 = vpack.c.b16 %v312, %v308
    %v433 = vpack.c.b16 %v313, %v309
    %v434 = vpack.c.b16 %v314, %v310
    %v435 = vpack.c.b16 %v319, %v315
    %v436 = vpack.c.b16 %v320, %v316
    %v437 = vpack.c.b16 %v321, %v317
    %v438 = vpack.c.b16 %v322, %v318
    %v439 = vpack.c.b16 %v327, %v323
    %v440 = vpack.c.b16 %v328, %v324
    %v441 = vpack.c.b16 %v329, %v325
    %v442 = vpack.c.b16 %v330, %v326
    %v443 = vpack.c.b16 %v335, %v331
    %v444 = vpack.c.b16 %v336, %v332
    %v445 = vpack.c.b16 %v337, %v333
    %v446 = vpack.c.b16 %v338, %v334
    %v447 = vpack.c.b16 %v343, %v339
    %v448 = vpack.c.b16 %v344, %v340
    %v449 = vpack.c.b16 %v345, %v341
    %v450 = vpack.c.b16 %v346, %v342
    %v451 = vpack.c.b16 %v351, %v347
    %v452 = vpack.c.b16 %v352, %v348
    %v453 = vpack.c.b16 %v353, %v349
    %v454 = vpack.c.b16 %v354, %v350
    %v455 = vpack.c.b16 %v359, %v355
    %v456 = vpack.c.b16 %v360, %v356
    %v457 = vpack.c.b16 %v361, %v357
    %v458 = vpack.c.b16 %v362, %v358
    %v459 = vpack.c.b16 %v367, %v363
    %v460 = vpack.c.b16 %v368, %v364
    %v461 = vpack.c.b16 %v369, %v365
    %v462 = vpack.c.b16 %v370, %v366
    %v463 = vpack.c.b16 %v375, %v371
    %v464 = vpack.c.b16 %v376, %v372
    %v465 = vpack.c.b16 %v377, %v373
    %v466 = vpack.c.b16 %v378, %v374
    %v467 = vpack.c.b16 %v383, %v379
    %v468 = vpack.c.b16 %v384, %v380
    %v469 = vpack.c.b16 %v385, %v381
    %v470 = vpack.c.b16 %v386, %v382
    %v471 = vpack.c.b16 %v391, %v387
    %v472 = vpack.c.b16 %v392, %v388
    %v473 = vpack.c.b16 %v393, %v389
    %v474 = vpack.c.b16 %v394, %v390
    %v475 = vpack.c.b16 %v399, %v395
    %v476 = vpack.c.b16 %v400, %v396
    %v477 = vpack.c.b16 %v401, %v397
    %v478 = vpack.c.b16 %v402, %v398
    %v479 = vpack.c.b16 %v407, %v403
    %v480 = vpack.c.b16 %v408, %v404
    %v481 = vpack.c.b16 %v409, %v405
    %v482 = vpack.c.b16 %v410, %v406
    %v483 = vpack.c.b16 %v415, %v411
    %v484 = vpack.c.b16 %v416, %v412
    %v485 = vpack.c.b16 %v417, %v413
    %v486 = vpack.c.b16 %v418, %v414
    %v487 = vpack.c.b16 %v423, %v419
    %v488 = vpack.c.b16 %v424, %v420
    %v489 = vpack.c.b16 %v425, %v421
    %v490 = vpack.c.b16 %v426, %v422
    %555 = vmatprep.subr.bf16.mxu0 %v428
    %556 = vmatpush1.bf16.msra.mxu0 %v427
    %557 = vmatprep.subr.bf16.mxu0 %v432
    %558 = vmatpush1.bf16.msra.mxu0 %v431
    %559 = vmatprep.subr.bf16.mxu0 %v436
    %560 = vmatpush1.bf16.msra.mxu0 %v435
    %561 = vmatprep.subr.bf16.mxu0 %v440
    %562 = vmatpush1.bf16.msra.mxu0 %v439
    %563 = vmatprep.subr.bf16.mxu0 %v444
    %564 = vmatpush1.bf16.msra.mxu0 %v443
    %565 = vmatprep.subr.bf16.mxu0 %v448
    %566 = vmatpush1.bf16.msra.mxu0 %v447
    %567 = vmatprep.subr.bf16.mxu0 %v452
    %568 = vmatpush1.bf16.msra.mxu0 %v451
    %569 = vmatprep.subr.bf16.mxu0 %v456
    %570 = vmatpush1.bf16.msra.mxu0 %v455
    %571 = vmatprep.subr.bf16.mxu0 %v460
    %572 = vmatpush1.bf16.msra.mxu0 %v459
    %573 = vmatprep.subr.bf16.mxu0 %v464
    %574 = vmatpush1.bf16.msra.mxu0 %v463
    %575 = vmatprep.subr.bf16.mxu0 %v468
    %576 = vmatpush1.bf16.msra.mxu0 %v467
    %577 = vmatprep.subr.bf16.mxu0 %v472
    %578 = vmatpush1.bf16.msra.mxu0 %v471
    %579 = vmatprep.subr.bf16.mxu0 %v476
    %580 = vmatpush1.bf16.msra.mxu0 %v475
    %581 = vmatprep.subr.bf16.mxu0 %v480
    %582 = vmatpush1.bf16.msra.mxu0 %v479
    %583 = vmatprep.subr.bf16.mxu0 %v484
    %584 = vmatpush1.bf16.msra.mxu0 %v483
    %585 = vmatprep.subr.bf16.mxu0 %v488
    %586 = vmatpush1.bf16.msra.mxu0 %v487
    %587 = vmatprep.mubr.bf16.mxu0 %v213
    %588 = vmatmul.mubr.bf16.gmra.mrb[0].mxu0 %v212
    %v589 = vpop.f32.mrb[0].mxu0
    %v590 = vadd.f32 %v218, %v589
    %v591 = vpop.f32.mrb[0].mxu0
    %v592 = vadd.f32 %v222, %v591
    %v593 = vpop.f32.mrb[0].mxu0
    %v594 = vpop.f32.mrb[0].mxu0
    %595 = vdwg.mxu0
    %596 = vmatprep.subr.bf16.mxu0 %v430
    %597 = vmatpush1.bf16.msra.mxu0 %v429
    %598 = vmatprep.subr.bf16.mxu0 %v434
    %599 = vmatpush1.bf16.msra.mxu0 %v433
    %600 = vmatprep.subr.bf16.mxu0 %v438
    %601 = vmatpush1.bf16.msra.mxu0 %v437
    %602 = vmatprep.subr.bf16.mxu0 %v442
    %603 = vmatpush1.bf16.msra.mxu0 %v441
    %604 = vmatprep.subr.bf16.mxu0 %v446
    %605 = vmatpush1.bf16.msra.mxu0 %v445
    %606 = vmatprep.subr.bf16.mxu0 %v450
    %607 = vmatpush1.bf16.msra.mxu0 %v449
    %608 = vmatprep.subr.bf16.mxu0 %v454
    %609 = vmatpush1.bf16.msra.mxu0 %v453
    %610 = vmatprep.subr.bf16.mxu0 %v458
    %611 = vmatpush1.bf16.msra.mxu0 %v457
    %612 = vmatprep.subr.bf16.mxu0 %v462
    %613 = vmatpush1.bf16.msra.mxu0 %v461
    %614 = vmatprep.subr.bf16.mxu0 %v466
    %615 = vmatpush1.bf16.msra.mxu0 %v465
    %616 = vmatprep.subr.bf16.mxu0 %v470
    %617 = vmatpush1.bf16.msra.mxu0 %v469
    %618 = vmatprep.subr.bf16.mxu0 %v474
    %619 = vmatpush1.bf16.msra.mxu0 %v473
    %620 = vmatprep.subr.bf16.mxu0 %v478
    %621 = vmatpush1.bf16.msra.mxu0 %v477
    %622 = vmatprep.subr.bf16.mxu0 %v482
    %623 = vmatpush1.bf16.msra.mxu0 %v481
    %624 = vmatprep.subr.bf16.mxu0 %v486
    %625 = vmatpush1.bf16.msra.mxu0 %v485
    %626 = vmatprep.subr.bf16.mxu0 %v490
    %627 = vmatpush1.bf16.msra.mxu0 %v489
    %628 = vmatprep.mubr.bf16.mxu0 %v213
    %629 = vmatmul.mubr.bf16.gmra.mrb[0].mxu0 %v212
    %v630 = vpop.f32.mrb[0].mxu0
    %v631 = vadd.f32 %v226, %v630
    %v632 = vpop.f32.mrb[0].mxu0
    %v633 = vadd.f32 %v230, %v632
    %v634 = vpop.f32.mrb[0].mxu0
    %v635 = vpop.f32.mrb[0].mxu0
    %636 = vdwg.mxu0
    %v637 = vxor.u32 %v590, 2147483648
    %v638 = vxor.u32 %v592, 2147483648
    %v639 = vxor.u32 %v631, 2147483648
    %v640 = vmul.f32 %v637, 1.442695
    %v641 = vpow.pop %v640
    %v642 = vmul.f32 %v638, 1.442695
    %v643 = vpow.pop %v642
    %v644 = vmul.f32 %v639, 1.442695
    %v645 = vpow.pop %v644
    %v646 = vadd.f32 %v641, 1.0
    %v647 = vadd.f32 %v643, 1.0
    %v648 = vadd.f32 %v645, 1.0
    %v649 = vrcp.pop %v646
    %v650 = vmul.f32 1.0, %v649
    %v651 = vrcp.pop %v647
    %v652 = vmul.f32 1.0, %v651
    %v653 = vrcp.pop %v648
    %v654 = vmul.f32 1.0, %v653
    %v655 = vtanh.pop %v633
    %v656 = vmul.f32 %v652, %v211
    %v657 = vmul.f32 %v650, %v655
    %v658 = vadd.f32 %v656, %v657
    %v659 = vtanh.pop %v658
    %v660 = vmul.f32 %v654, %v659
    %661 = vst [vmem:[#allocation13] sm:$0xff] %v660
    %662 = vst [vmem:[#allocation15] sm:$0xff] %v658
    %v663 = vld [vmem:[#allocation10] sm:$0xff]
    %v664 = vld [vmem:[#allocation10 + $0x8] sm:$0xff]
    %v665 = vld [vmem:[#allocation10 + $0x10] sm:$0xff]
    %v666 = vld [vmem:[#allocation10 + $0x18] sm:$0xff]
    %v667 = vld [vmem:[#allocation10 + $0x20] sm:$0xff]
    %v668 = vld [vmem:[#allocation10 + $0x28] sm:$0xff]
    %v669 = vld [vmem:[#allocation10 + $0x30] sm:$0xff]
    %v670 = vld [vmem:[#allocation10 + $0x38] sm:$0xff]
    %v671 = vld [vmem:[#allocation10 + $0x40] sm:$0xff]
    %v672 = vld [vmem:[#allocation10 + $0x48] sm:$0xff]
    %v673 = vld [vmem:[#allocation10 + $0x50] sm:$0xff]
    %v674 = vld [vmem:[#allocation10 + $0x58] sm:$0xff]
    %v675 = vld [vmem:[#allocation10 + $0x60] sm:$0xff]
    %v676 = vld [vmem:[#allocation10 + $0x68] sm:$0xff]
    %v677 = vld [vmem:[#allocation10 + $0x70] sm:$0xff]
    %v678 = vld [vmem:[#allocation10 + $0x78] sm:$0xff]
    %v679 = vld [vmem:[#allocation10 + $0x80] sm:$0xff]
    %v680 = vld [vmem:[#allocation10 + $0x88] sm:$0xff]
    %v681 = vld [vmem:[#allocation10 + $0x90] sm:$0xff]
    %v682 = vld [vmem:[#allocation10 + $0x98] sm:$0xff]
    %v683 = vld [vmem:[#allocation10 + $0xa0] sm:$0xff]
    %v684 = vld [vmem:[#allocation10 + $0xa8] sm:$0xff]
    %v685 = vld [vmem:[#allocation10 + $0xb0] sm:$0xff]
    %v686 = vld [vmem:[#allocation10 + $0xb8] sm:$0xff]
    %v687 = vld [vmem:[#allocation10 + $0xc0] sm:$0xff]
    %v688 = vld [vmem:[#allocation10 + $0xc8] sm:$0xff]
    %v689 = vld [vmem:[#allocation10 + $0xd0] sm:$0xff]
    %v690 = vld [vmem:[#allocation10 + $0xd8] sm:$0xff]
    %v691 = vld [vmem:[#allocation10 + $0xe0] sm:$0xff]
    %v692 = vld [vmem:[#allocation10 + $0xe8] sm:$0xff]
    %v693 = vld [vmem:[#allocation10 + $0xf0] sm:$0xff]
    %v694 = vld [vmem:[#allocation10 + $0xf8] sm:$0xff]
    %v695 = vld [vmem:[#allocation10 + $0x100] sm:$0xff]
    %v696 = vld [vmem:[#allocation10 + $0x108] sm:$0xff]
    %v697 = vld [vmem:[#allocation10 + $0x110] sm:$0xff]
    %v698 = vld [vmem:[#allocation10 + $0x118] sm:$0xff]
    %v699 = vld [vmem:[#allocation10 + $0x120] sm:$0xff]
    %v700 = vld [vmem:[#allocation10 + $0x128] sm:$0xff]
    %v701 = vld [vmem:[#allocation10 + $0x130] sm:$0xff]
    %v702 = vld [vmem:[#allocation10 + $0x138] sm:$0xff]
    %v703 = vld [vmem:[#allocation10 + $0x140] sm:$0xff]
    %v704 = vld [vmem:[#allocation10 + $0x148] sm:$0xff]
    %v705 = vld [vmem:[#allocation10 + $0x150] sm:$0xff]
    %v706 = vld [vmem:[#allocation10 + $0x158] sm:$0xff]
    %v707 = vld [vmem:[#allocation10 + $0x160] sm:$0xff]
    %v708 = vld [vmem:[#allocation10 + $0x168] sm:$0xff]
    %v709 = vld [vmem:[#allocation10 + $0x170] sm:$0xff]
    %v710 = vld [vmem:[#allocation10 + $0x178] sm:$0xff]
    %v711 = vld [vmem:[#allocation10 + $0x180] sm:$0xff]
    %v712 = vld [vmem:[#allocation10 + $0x188] sm:$0xff]
    %v713 = vld [vmem:[#allocation10 + $0x190] sm:$0xff]
    %v714 = vld [vmem:[#allocation10 + $0x198] sm:$0xff]
    %v715 = vld [vmem:[#allocation10 + $0x1a0] sm:$0xff]
    %v716 = vld [vmem:[#allocation10 + $0x1a8] sm:$0xff]
    %v717 = vld [vmem:[#allocation10 + $0x1b0] sm:$0xff]
    %v718 = vld [vmem:[#allocation10 + $0x1b8] sm:$0xff]
    %v719 = vld [vmem:[#allocation10 + $0x1c0] sm:$0xff]
    %v720 = vld [vmem:[#allocation10 + $0x1c8] sm:$0xff]
    %v721 = vld [vmem:[#allocation10 + $0x1d0] sm:$0xff]
    %v722 = vld [vmem:[#allocation10 + $0x1d8] sm:$0xff]
    %v723 = vld [vmem:[#allocation10 + $0x1e0] sm:$0xff]
    %v724 = vld [vmem:[#allocation10 + $0x1e8] sm:$0xff]
    %v725 = vld [vmem:[#allocation10 + $0x1f0] sm:$0xff]
    %v726 = vld [vmem:[#allocation10 + $0x1f8] sm:$0xff]
    %v727 = vld [vmem:[%s6] sm:$0xf]
    %s728 = scalar_lea.vmem [#allocation6], 8
    %v729 = vld [vmem:[%s728] sm:$0xff]
    %s730 = scalar_lea.vmem [#allocation7], 8
    %v731 = vld [vmem:[%s730] sm:$0xff]
    %v732 = vpack.c.bf16 %v660, %v660
    %v733 = vpack.c.bf16 %v729, %v729
    %v735 = vlaneseq
    %v736 = vshrl.u32 %v735, 7
    %v737 = vsub.s32 0, %v736
    %v738 = vrot.slane %v727, %v737
    %v739 = vlaneseq
    %v740 = vshrl.u32 %v739, 7
    %v741 = vsub.s32 1, %v740
    %v742 = vrot.slane %v727, %v741
    %v743 = vlaneseq
    %v744 = vshrl.u32 %v743, 7
    %v745 = vsub.s32 2, %v744
    %v746 = vrot.slane %v727, %v745
    %v747 = vlaneseq
    %v748 = vshrl.u32 %v747, 7
    %v749 = vsub.s32 3, %v748
    %v750 = vrot.slane %v727, %v749
    %v819 = vunpack.c.l.b16 %v663
    %v820 = vunpack.c.h.b16 %v663
    %v821 = vunpack.c.l.b16 %v664
    %v822 = vunpack.c.h.b16 %v664
    %v823 = vunpack.c.l.b16 %v665
    %v824 = vunpack.c.h.b16 %v665
    %v825 = vunpack.c.l.b16 %v666
    %v826 = vunpack.c.h.b16 %v666
    %v827 = vunpack.c.l.b16 %v667
    %v828 = vunpack.c.h.b16 %v667
    %v829 = vunpack.c.l.b16 %v668
    %v830 = vunpack.c.h.b16 %v668
    %v831 = vunpack.c.l.b16 %v669
    %v832 = vunpack.c.h.b16 %v669
    %v833 = vunpack.c.l.b16 %v670
    %v834 = vunpack.c.h.b16 %v670
    %v835 = vunpack.c.l.b16 %v671
    %v836 = vunpack.c.h.b16 %v671
    %v837 = vunpack.c.l.b16 %v672
    %v838 = vunpack.c.h.b16 %v672
    %v839 = vunpack.c.l.b16 %v673
    %v840 = vunpack.c.h.b16 %v673
    %v841 = vunpack.c.l.b16 %v674
    %v842 = vunpack.c.h.b16 %v674
    %v843 = vunpack.c.l.b16 %v675
    %v844 = vunpack.c.h.b16 %v675
    %v845 = vunpack.c.l.b16 %v676
    %v846 = vunpack.c.h.b16 %v676
    %v847 = vunpack.c.l.b16 %v677
    %v848 = vunpack.c.h.b16 %v677
    %v849 = vunpack.c.l.b16 %v678
    %v850 = vunpack.c.h.b16 %v678
    %v851 = vunpack.c.l.b16 %v679
    %v852 = vunpack.c.h.b16 %v679
    %v853 = vunpack.c.l.b16 %v680
    %v854 = vunpack.c.h.b16 %v680
    %v855 = vunpack.c.l.b16 %v681
    %v856 = vunpack.c.h.b16 %v681
    %v857 = vunpack.c.l.b16 %v682
    %v858 = vunpack.c.h.b16 %v682
    %v859 = vunpack.c.l.b16 %v683
    %v860 = vunpack.c.h.b16 %v683
    %v861 = vunpack.c.l.b16 %v684
    %v862 = vunpack.c.h.b16 %v684
    %v863 = vunpack.c.l.b16 %v685
    %v864 = vunpack.c.h.b16 %v685
    %v865 = vunpack.c.l.b16 %v686
    %v866 = vunpack.c.h.b16 %v686
    %v867 = vunpack.c.l.b16 %v687
    %v868 = vunpack.c.h.b16 %v687
    %v869 = vunpack.c.l.b16 %v688
    %v870 = vunpack.c.h.b16 %v688
    %v871 = vunpack.c.l.b16 %v689
    %v872 = vunpack.c.h.b16 %v689
    %v873 = vunpack.c.l.b16 %v690
    %v874 = vunpack.c.h.b16 %v690
    %v875 = vunpack.c.l.b16 %v691
    %v876 = vunpack.c.h.b16 %v691
    %v877 = vunpack.c.l.b16 %v692
    %v878 = vunpack.c.h.b16 %v692
    %v879 = vunpack.c.l.b16 %v693
    %v880 = vunpack.c.h.b16 %v693
    %v881 = vunpack.c.l.b16 %v694
    %v882 = vunpack.c.h.b16 %v694
    %v883 = vunpack.c.l.b16 %v695
    %v884 = vunpack.c.h.b16 %v695
    %v885 = vunpack.c.l.b16 %v696
    %v886 = vunpack.c.h.b16 %v696
    %v887 = vunpack.c.l.b16 %v697
    %v888 = vunpack.c.h.b16 %v697
    %v889 = vunpack.c.l.b16 %v698
    %v890 = vunpack.c.h.b16 %v698
    %v891 = vunpack.c.l.b16 %v699
    %v892 = vunpack.c.h.b16 %v699
    %v893 = vunpack.c.l.b16 %v700
    %v894 = vunpack.c.h.b16 %v700
    %v895 = vunpack.c.l.b16 %v701
    %v896 = vunpack.c.h.b16 %v701
    %v897 = vunpack.c.l.b16 %v702
    %v898 = vunpack.c.h.b16 %v702
    %v899 = vunpack.c.l.b16 %v703
    %v900 = vunpack.c.h.b16 %v703
    %v901 = vunpack.c.l.b16 %v704
    %v902 = vunpack.c.h.b16 %v704
    %v903 = vunpack.c.l.b16 %v705
    %v904 = vunpack.c.h.b16 %v705
    %v905 = vunpack.c.l.b16 %v706
    %v906 = vunpack.c.h.b16 %v706
    %v907 = vunpack.c.l.b16 %v707
    %v908 = vunpack.c.h.b16 %v707
    %v909 = vunpack.c.l.b16 %v708
    %v910 = vunpack.c.h.b16 %v708
    %v911 = vunpack.c.l.b16 %v709
    %v912 = vunpack.c.h.b16 %v709
    %v913 = vunpack.c.l.b16 %v710
    %v914 = vunpack.c.h.b16 %v710
    %v915 = vunpack.c.l.b16 %v711
    %v916 = vunpack.c.h.b16 %v711
    %v917 = vunpack.c.l.b16 %v712
    %v918 = vunpack.c.h.b16 %v712
    %v919 = vunpack.c.l.b16 %v713
    %v920 = vunpack.c.h.b16 %v713
    %v921 = vunpack.c.l.b16 %v714
    %v922 = vunpack.c.h.b16 %v714
    %v923 = vunpack.c.l.b16 %v715
    %v924 = vunpack.c.h.b16 %v715
    %v925 = vunpack.c.l.b16 %v716
    %v926 = vunpack.c.h.b16 %v716
    %v927 = vunpack.c.l.b16 %v717
    %v928 = vunpack.c.h.b16 %v717
    %v929 = vunpack.c.l.b16 %v718
    %v930 = vunpack.c.h.b16 %v718
    %v931 = vunpack.c.l.b16 %v719
    %v932 = vunpack.c.h.b16 %v719
    %v933 = vunpack.c.l.b16 %v720
    %v934 = vunpack.c.h.b16 %v720
    %v935 = vunpack.c.l.b16 %v721
    %v936 = vunpack.c.h.b16 %v721
    %v937 = vunpack.c.l.b16 %v722
    %v938 = vunpack.c.h.b16 %v722
    %v939 = vunpack.c.l.b16 %v723
    %v940 = vunpack.c.h.b16 %v723
    %v941 = vunpack.c.l.b16 %v724
    %v942 = vunpack.c.h.b16 %v724
    %v943 = vunpack.c.l.b16 %v725
    %v944 = vunpack.c.h.b16 %v725
    %v945 = vunpack.c.l.b16 %v726
    %v946 = vunpack.c.h.b16 %v726
    %v947 = vpack.c.b16 %v823, %v819
    %v948 = vpack.c.b16 %v824, %v820
    %v949 = vpack.c.b16 %v825, %v821
    %v950 = vpack.c.b16 %v826, %v822
    %v951 = vpack.c.b16 %v831, %v827
    %v952 = vpack.c.b16 %v832, %v828
    %v953 = vpack.c.b16 %v833, %v829
    %v954 = vpack.c.b16 %v834, %v830
    %v955 = vpack.c.b16 %v839, %v835
    %v956 = vpack.c.b16 %v840, %v836
    %v957 = vpack.c.b16 %v841, %v837
    %v958 = vpack.c.b16 %v842, %v838
    %v959 = vpack.c.b16 %v847, %v843
    %v960 = vpack.c.b16 %v848, %v844
    %v961 = vpack.c.b16 %v849, %v845
    %v962 = vpack.c.b16 %v850, %v846
    %v963 = vpack.c.b16 %v855, %v851
    %v964 = vpack.c.b16 %v856, %v852
    %v965 = vpack.c.b16 %v857, %v853
    %v966 = vpack.c.b16 %v858, %v854
    %v967 = vpack.c.b16 %v863, %v859
    %v968 = vpack.c.b16 %v864, %v860
    %v969 = vpack.c.b16 %v865, %v861
    %v970 = vpack.c.b16 %v866, %v862
    %v971 = vpack.c.b16 %v871, %v867
    %v972 = vpack.c.b16 %v872, %v868
    %v973 = vpack.c.b16 %v873, %v869
    %v974 = vpack.c.b16 %v874, %v870
    %v975 = vpack.c.b16 %v879, %v875
    %v976 = vpack.c.b16 %v880, %v876
    %v977 = vpack.c.b16 %v881, %v877
    %v978 = vpack.c.b16 %v882, %v878
    %v979 = vpack.c.b16 %v887, %v883
    %v980 = vpack.c.b16 %v888, %v884
    %v981 = vpack.c.b16 %v889, %v885
    %v982 = vpack.c.b16 %v890, %v886
    %v983 = vpack.c.b16 %v895, %v891
    %v984 = vpack.c.b16 %v896, %v892
    %v985 = vpack.c.b16 %v897, %v893
    %v986 = vpack.c.b16 %v898, %v894
    %v987 = vpack.c.b16 %v903, %v899
    %v988 = vpack.c.b16 %v904, %v900
    %v989 = vpack.c.b16 %v905, %v901
    %v990 = vpack.c.b16 %v906, %v902
    %v991 = vpack.c.b16 %v911, %v907
    %v992 = vpack.c.b16 %v912, %v908
    %v993 = vpack.c.b16 %v913, %v909
    %v994 = vpack.c.b16 %v914, %v910
    %v995 = vpack.c.b16 %v919, %v915
    %v996 = vpack.c.b16 %v920, %v916
    %v997 = vpack.c.b16 %v921, %v917
    %v998 = vpack.c.b16 %v922, %v918
    %v999 = vpack.c.b16 %v927, %v923
    %v1000 = vpack.c.b16 %v928, %v924
    %v1001 = vpack.c.b16 %v929, %v925
    %v1002 = vpack.c.b16 %v930, %v926
    %v1003 = vpack.c.b16 %v935, %v931
    %v1004 = vpack.c.b16 %v936, %v932
    %v1005 = vpack.c.b16 %v937, %v933
    %v1006 = vpack.c.b16 %v938, %v934
    %v1007 = vpack.c.b16 %v943, %v939
    %v1008 = vpack.c.b16 %v944, %v940
    %v1009 = vpack.c.b16 %v945, %v941
    %v1010 = vpack.c.b16 %v946, %v942
    %1075 = vmatprep.subr.bf16.mxu0 %v948
    %1076 = vmatpush1.bf16.msra.mxu0 %v947
    %1077 = vmatprep.subr.bf16.mxu0 %v952
    %1078 = vmatpush1.bf16.msra.mxu0 %v951
    %1079 = vmatprep.subr.bf16.mxu0 %v956
    %1080 = vmatpush1.bf16.msra.mxu0 %v955
    %1081 = vmatprep.subr.bf16.mxu0 %v960
    %1082 = vmatpush1.bf16.msra.mxu0 %v959
    %1083 = vmatprep.subr.bf16.mxu0 %v964
    %1084 = vmatpush1.bf16.msra.mxu0 %v963
    %1085 = vmatprep.subr.bf16.mxu0 %v968
    %1086 = vmatpush1.bf16.msra.mxu0 %v967
    %1087 = vmatprep.subr.bf16.mxu0 %v972
    %1088 = vmatpush1.bf16.msra.mxu0 %v971
    %1089 = vmatprep.subr.bf16.mxu0 %v976
    %1090 = vmatpush1.bf16.msra.mxu0 %v975
    %1091 = vmatprep.subr.bf16.mxu0 %v980
    %1092 = vmatpush1.bf16.msra.mxu0 %v979
    %1093 = vmatprep.subr.bf16.mxu0 %v984
    %1094 = vmatpush1.bf16.msra.mxu0 %v983
    %1095 = vmatprep.subr.bf16.mxu0 %v988
    %1096 = vmatpush1.bf16.msra.mxu0 %v987
    %1097 = vmatprep.subr.bf16.mxu0 %v992
    %1098 = vmatpush1.bf16.msra.mxu0 %v991
    %1099 = vmatprep.subr.bf16.mxu0 %v996
    %1100 = vmatpush1.bf16.msra.mxu0 %v995
    %1101 = vmatprep.subr.bf16.mxu0 %v1000
    %1102 = vmatpush1.bf16.msra.mxu0 %v999
    %1103 = vmatprep.subr.bf16.mxu0 %v1004
    %1104 = vmatpush1.bf16.msra.mxu0 %v1003
    %1105 = vmatprep.subr.bf16.mxu0 %v1008
    %1106 = vmatpush1.bf16.msra.mxu0 %v1007
    %1107 = vmatprep.mubr.bf16.mxu0 %v733
    %1108 = vmatmul.mubr.bf16.gmra.mrb[0].mxu0 %v732
    %v1109 = vpop.f32.mrb[0].mxu0
    %v1110 = vadd.f32 %v738, %v1109
    %v1111 = vpop.f32.mrb[0].mxu0
    %v1112 = vadd.f32 %v742, %v1111
    %v1113 = vpop.f32.mrb[0].mxu0
    %v1114 = vpop.f32.mrb[0].mxu0
    %1115 = vdwg.mxu0
    %1116 = vmatprep.subr.bf16.mxu0 %v950
    %1117 = vmatpush1.bf16.msra.mxu0 %v949
    %1118 = vmatprep.subr.bf16.mxu0 %v954
    %1119 = vmatpush1.bf16.msra.mxu0 %v953
    %1120 = vmatprep.subr.bf16.mxu0 %v958
    %1121 = vmatpush1.bf16.msra.mxu0 %v957
    %1122 = vmatprep.subr.bf16.mxu0 %v962
    %1123 = vmatpush1.bf16.msra.mxu0 %v961
    %1124 = vmatprep.subr.bf16.mxu0 %v966
    %1125 = vmatpush1.bf16.msra.mxu0 %v965
    %1126 = vmatprep.subr.bf16.mxu0 %v970
    %1127 = vmatpush1.bf16.msra.mxu0 %v969
    %1128 = vmatprep.subr.bf16.mxu0 %v974
    %1129 = vmatpush1.bf16.msra.mxu0 %v973
    %1130 = vmatprep.subr.bf16.mxu0 %v978
    %1131 = vmatpush1.bf16.msra.mxu0 %v977
    %1132 = vmatprep.subr.bf16.mxu0 %v982
    %1133 = vmatpush1.bf16.msra.mxu0 %v981
    %1134 = vmatprep.subr.bf16.mxu0 %v986
    %1135 = vmatpush1.bf16.msra.mxu0 %v985
    %1136 = vmatprep.subr.bf16.mxu0 %v990
    %1137 = vmatpush1.bf16.msra.mxu0 %v989
    %1138 = vmatprep.subr.bf16.mxu0 %v994
    %1139 = vmatpush1.bf16.msra.mxu0 %v993
    %1140 = vmatprep.subr.bf16.mxu0 %v998
    %1141 = vmatpush1.bf16.msra.mxu0 %v997
    %1142 = vmatprep.subr.bf16.mxu0 %v1002
    %1143 = vmatpush1.bf16.msra.mxu0 %v1001
    %1144 = vmatprep.subr.bf16.mxu0 %v1006
    %1145 = vmatpush1.bf16.msra.mxu0 %v1005
    %1146 = vmatprep.subr.bf16.mxu0 %v1010
    %1147 = vmatpush1.bf16.msra.mxu0 %v1009
    %1148 = vmatprep.mubr.bf16.mxu0 %v733
    %1149 = vmatmul.mubr.bf16.gmra.mrb[0].mxu0 %v732
    %v1150 = vpop.f32.mrb[0].mxu0
    %v1151 = vadd.f32 %v746, %v1150
    %v1152 = vpop.f32.mrb[0].mxu0
    %v1153 = vadd.f32 %v750, %v1152
    %v1154 = vpop.f32.mrb[0].mxu0
    %v1155 = vpop.f32.mrb[0].mxu0
    %1156 = vdwg.mxu0
    %v1157 = vxor.u32 %v1110, 2147483648
    %v1158 = vxor.u32 %v1112, 2147483648
    %v1159 = vxor.u32 %v1151, 2147483648
    %v1160 = vmul.f32 %v1157, 1.442695
    %v1161 = vpow.pop %v1160
    %v1162 = vmul.f32 %v1158, 1.442695
    %v1163 = vpow.pop %v1162
    %v1164 = vmul.f32 %v1159, 1.442695
    %v1165 = vpow.pop %v1164
    %v1166 = vadd.f32 %v1161, 1.0
    %v1167 = vadd.f32 %v1163, 1.0
    %v1168 = vadd.f32 %v1165, 1.0
    %v1169 = vrcp.pop %v1166
    %v1170 = vmul.f32 1.0, %v1169
    %v1171 = vrcp.pop %v1167
    %v1172 = vmul.f32 1.0, %v1171
    %v1173 = vrcp.pop %v1168
    %v1174 = vmul.f32 1.0, %v1173
    %v1175 = vtanh.pop %v1153
    %v1176 = vmul.f32 %v1172, %v731
    %v1177 = vmul.f32 %v1170, %v1175
    %v1178 = vadd.f32 %v1176, %v1177
    %v1179 = vtanh.pop %v1178
    %v1180 = vmul.f32 %v1174, %v1179
    %s1181 = scalar_lea.vmem [#allocation13], 8
    %1182 = vst [vmem:[%s1181] sm:$0xff] %v1180
    %s1183 = scalar_lea.vmem [#allocation15], 8
    %1184 = vst [vmem:[%s1183] sm:$0xff] %v1178
    %v1185 = vpack.c.bf16 %v1180, %v1180
    %v1186 = vld [vmem:[%s7] sm:$0xf]
    %v1187 = vld [vmem:[%s7 + $0x4] sm:$0xf]
    %v1188 = vld [vmem:[%s7 + $0x8] sm:$0xf]
    %v1189 = vld [vmem:[%s7 + $0xc] sm:$0xf]
    %v1190 = vld [vmem:[%s7 + $0x10] sm:$0xf]
    %v1191 = vld [vmem:[%s7 + $0x14] sm:$0xf]
    %v1192 = vld [vmem:[%s7 + $0x18] sm:$0xf]
    %v1193 = vld [vmem:[%s7 + $0x1c] sm:$0xf]
    %v1194 = vld [vmem:[%s7 + $0x20] sm:$0xf]
    %v1195 = vld [vmem:[%s7 + $0x24] sm:$0xf]
    %v1196 = vld [vmem:[%s7 + $0x28] sm:$0xf]
    %v1197 = vld [vmem:[%s7 + $0x2c] sm:$0xf]
    %v1198 = vld [vmem:[%s7 + $0x30] sm:$0xf]
    %v1199 = vld [vmem:[%s7 + $0x34] sm:$0xf]
    %v1200 = vld [vmem:[%s7 + $0x38] sm:$0xf]
    %v1201 = vld [vmem:[%s7 + $0x3c] sm:$0xf]
    %v1202 = vld [vmem:[%s8] sm:$0x1]
    %v1204 = vlaneseq
    %v1205 = vshrl.u32 %v1204, 7
    %v1206 = vsub.s32 0, %v1205
    %v1207 = vrot.slane %v1202, %v1206
    %v1225 = vunpack.c.l.b16 %v1186
    %v1226 = vunpack.c.l.b16 %v1187
    %v1227 = vunpack.c.l.b16 %v1188
    %v1228 = vunpack.c.l.b16 %v1189
    %v1229 = vunpack.c.l.b16 %v1190
    %v1230 = vunpack.c.l.b16 %v1191
    %v1231 = vunpack.c.l.b16 %v1192
    %v1232 = vunpack.c.l.b16 %v1193
    %v1233 = vunpack.c.l.b16 %v1194
    %v1234 = vunpack.c.l.b16 %v1195
    %v1235 = vunpack.c.l.b16 %v1196
    %v1236 = vunpack.c.l.b16 %v1197
    %v1237 = vunpack.c.l.b16 %v1198
    %v1238 = vunpack.c.l.b16 %v1199
    %v1239 = vunpack.c.l.b16 %v1200
    %v1240 = vunpack.c.l.b16 %v1201
    %v1241 = vpack.c.b16 %v1226, %v1225
    %v1242 = vpack.c.b16 %v1228, %v1227
    %v1243 = vpack.c.b16 %v1230, %v1229
    %v1244 = vpack.c.b16 %v1232, %v1231
    %v1245 = vpack.c.b16 %v1234, %v1233
    %v1246 = vpack.c.b16 %v1236, %v1235
    %v1247 = vpack.c.b16 %v1238, %v1237
    %v1248 = vpack.c.b16 %v1240, %v1239
    %1257 = vmatprep.subr.bf16.mxu0 0
    %1258 = vmatpush1.bf16.msra.mxu0 %v1241
    %1259 = vmatprep.subr.bf16.mxu0 0
    %1260 = vmatpush1.bf16.msra.mxu0 %v1242
    %1261 = vmatprep.subr.bf16.mxu0 0
    %1262 = vmatpush1.bf16.msra.mxu0 %v1243
    %1263 = vmatprep.subr.bf16.mxu0 0
    %1264 = vmatpush1.bf16.msra.mxu0 %v1244
    %1265 = vmatprep.subr.bf16.mxu0 0
    %1266 = vmatpush1.bf16.msra.mxu0 %v1245
    %1267 = vmatprep.subr.bf16.mxu0 0
    %1268 = vmatpush1.bf16.msra.mxu0 %v1246
    %1269 = vmatprep.subr.bf16.mxu0 0
    %1270 = vmatpush1.bf16.msra.mxu0 %v1247
    %1271 = vmatprep.subr.bf16.mxu0 0
    %1272 = vmatpush1.bf16.msra.mxu0 %v1248
    %1273 = vmatprep.subr.bf16.mxu0 0
    %1274 = vmatpush1.bf16.msra.mxu0 0
    %1275 = vmatprep.subr.bf16.mxu0 0
    %1276 = vmatpush1.bf16.msra.mxu0 0
    %1277 = vmatprep.subr.bf16.mxu0 0
    %1278 = vmatpush1.bf16.msra.mxu0 0
    %1279 = vmatprep.subr.bf16.mxu0 0
    %1280 = vmatpush1.bf16.msra.mxu0 0
    %1281 = vmatprep.subr.bf16.mxu0 0
    %1282 = vmatpush1.bf16.msra.mxu0 0
    %1283 = vmatprep.subr.bf16.mxu0 0
    %1284 = vmatpush1.bf16.msra.mxu0 0
    %1285 = vmatprep.subr.bf16.mxu0 0
    %1286 = vmatpush1.bf16.msra.mxu0 0
    %1287 = vmatprep.subr.bf16.mxu0 0
    %1288 = vmatpush1.bf16.msra.mxu0 0
    %1289 = vmatprep.mubr.bf16.mxu0 0
    %1290 = vmatmul.mubr.bf16.gmra.mrb[0].mxu0 %v1185
    %v1291 = vpop.f32.mrb[0].mxu0
    %v1292 = vadd.f32 %v1207, %v1291
    %v1293 = vpop.f32.mrb[0].mxu0
    %v1294 = vpop.f32.mrb[0].mxu0
    %v1295 = vpop.f32.mrb[0].mxu0
    %1296 = vdwg.mxu0
    %1297 = vst [vmem:[#allocation12] sm:$0xff] %v1292
    // Predicated region
    $region58: #{decoder_forward.1} parent=1 // pred_check
      _
    $region59: #{decoder_forward.1} parent=1 // pred_check_branch
      %1299 = sbr.rel (0) target = $region61
    $region60: #{decoder_forward.1} parent=1 // pred_region
      %s1301 = ssub.s32 128, 128
      %1302 = vsyncadd [#allocation4], %s1301
      %s1304 = sshll.u32 [#allocation12], 4
      %s1305 = int_to_ptr.vmem [resolvable:$true] %s1304
      %1307 = dma.vmem_to_hbm [thread:$0]  %s1305, 128, %s9, [#allocation4]
    $region61: #{decoder_forward.1} parent=1 // pred_fallthru
      _
    // Predicated region
    $region62: #{decoder_forward.1} parent=1 // pred_check
      _
    $region63: #{decoder_forward.1} parent=1 // pred_check_branch
      %1309 = sbr.rel (0) target = $region65
    $region64: #{decoder_forward.1} parent=1 // pred_region
      %s1311 = ssub.s32 256, 256
      %1312 = vsyncadd [#allocation14], %s1311
      %s1313 = sshll.u32 [#allocation13], 4
      %s1314 = int_to_ptr.vmem [resolvable:$true] %s1313
      %1319 = dma.vmem_to_hbm [thread:$0]  %s1314, 256, %s10, [#allocation14], 128, 128, 8
    $region65: #{decoder_forward.1} parent=1 // pred_fallthru
      _
    // Predicated region
    $region66: #{decoder_forward.1} parent=1 // pred_check
      _
    $region67: #{decoder_forward.1} parent=1 // pred_check_branch
      %1321 = sbr.rel (0) target = $region69
    $region68: #{decoder_forward.1} parent=1 // pred_region
      %s1323 = ssub.s32 256, 256
      %1324 = vsyncadd [#allocation14], %s1323
      %s1325 = sshll.u32 [#allocation15], 4
      %s1326 = int_to_ptr.vmem [resolvable:$true] %s1325
      %1331 = dma.vmem_to_hbm [thread:$0]  %s1326, 256, %s11, [#allocation14], 128, 128, 8
    $region69: #{decoder_forward.1} parent=1 // pred_fallthru
      _
    // Predicated region
    $region70: #{decoder_forward.1} parent=1 // pred_check
      _
    $region71: #{decoder_forward.1} parent=1 // pred_check_branch
      %1333 = sbr.rel (0) target = $region73
    $region72: #{decoder_forward.1} parent=1 // pred_region
      %1334 = dma.done [#allocation4], 128
    $region73: #{decoder_forward.1} parent=1 // pred_fallthru
      _
    // Predicated region
    $region74: #{decoder_forward.1} parent=1 // pred_check
      _
    $region75: #{decoder_forward.1} parent=1 // pred_check_branch
      %1336 = sbr.rel (0) target = $region77
    $region76: #{decoder_forward.1} parent=1 // pred_region
      %1337 = dma.done [#allocation14], 256
    $region77: #{decoder_forward.1} parent=1 // pred_fallthru
      _
    // Predicated region
    $region78: #{decoder_forward.1} parent=1 // pred_check
      _
    $region79: #{decoder_forward.1} parent=1 // pred_check_branch
      %1339 = sbr.rel (0) target = $region81
    $region80: #{decoder_forward.1} parent=1 // pred_region
      %1340 = dma.done [#allocation14], 256
    $region81: #{decoder_forward.1} parent=1 // pred_fallthru
      _
    %1341 = vsyncpa [#allocation3], 1
    %1342 = vsyncpa [#allocation8], 1
    %1343 = vsyncpa [#allocation11], 1
    %1344 = vsyncpa [#allocation4], 1
    %1345 = vsyncpa [#allocation14], 1
    %1346 = vsyncpa [#allocation5], 1

</llo_original>
